<compile_context>
chip_gen: v7x
topology: tpu7x:2x2x1
jax: 0.10.0
libtpu: 0.0.40
codegen_flags: <defaults>
</compile_context>

<pallas_src>
import functools
import math

import jax
import jax.numpy as jnp
from jax.experimental import pallas as pl
from jax.experimental.pallas import tpu as pltpu


# ---------------------------------------------------------------------------
# helpers
# ---------------------------------------------------------------------------
def _cdiv(a, b):
    return -(-a // b)


def _round_up(v, m):
    return ((v + m - 1) // m) * m


def _vmem_caps(vmem_budget_bytes=None):
    """Return (physical VMEM capacity, block working-set budget) in bytes."""
    try:
        cap = int(pltpu.get_tpu_info().vmem_capacity_bytes)
    except Exception:
        cap = 64 * 1024 * 1024            # conservative (v7x-sized) fallback
    if vmem_budget_bytes is not None:
        return cap, int(vmem_budget_bytes)
    # v5e/v6e: 128 MiB physical VMEM -> ~42 MiB of blocks; v7x: 64 MiB -> 16 MiB.
    budget = cap // 3 if cap >= 96 * 1024 * 1024 else cap // 4
    return cap, budget


def _pick_tile_m(n, lane_width, per_elem_bytes, budget):
    """Largest row tile (multiple of 8) fitting `budget`, capped so the
    'parallel' row axis keeps >= ~2-4 grid steps (v7x has 2 TensorCores)."""
    if n < 8:
        return n
    n_pad = _round_up(n, 8)
    per_row = max(lane_width * per_elem_bytes, 1)
    tile = int(budget // per_row)
    tile = max(8, min(tile, 8192))
    tile = (tile // 8) * 8
    if n_pad >= 16:
        tile = min(tile, max(8, _round_up(_cdiv(n_pad, 4), 8)))
    return int(min(tile, n_pad))


def _vmem_limit_bytes(cap, x_blk, t_blk, tile_elems):
    """Right-size the Mosaic VMEM limit from the actual working set."""
    hard = 2 * (x_blk + t_blk)            # double-buffered input blocks
    if hard > cap * 3 // 4:
        raise ValueError(
            "tile_m/tile_c working set exceeds this chip's VMEM; use smaller tiles")
    need = hard + tile_elems * 24 + (6 << 20)   # ~6 f32 temporaries + headroom
    return int(min(max(need, 24 << 20), cap * 3 // 4))


# ---------------------------------------------------------------------------
# kernels
# ---------------------------------------------------------------------------
def _ce_dense_kernel(x_ref, y_ref, out_ref, *, label_smooth, log_eps, log_1m_eps,
                     n_rows, n_classes, tile_m, num_tiles, need_mask):
    """Single pass, full class axis per block, dense/soft targets."""
    x = x_ref[...].astype(jnp.float32)                     # (TM, C)
    y = y_ref[...].astype(jnp.float32)                     # (TM, C)
    if label_smooth:
        y = y * (1.0 - label_smooth) + label_smooth / n_classes

    # log-softmax; clamp(p, eps, 1-eps) == clamp(log p, log eps, log(1-eps)).
    m = jnp.max(x, axis=-1, keepdims=True)
    xs = x - m
    lse = jnp.log(jnp.sum(jnp.exp(xs), axis=-1, keepdims=True))
    log_p = jnp.clip(xs - lse, log_eps, log_1m_eps)
    loss = -y * log_p                                      # (TM, C)

    if need_mask:
        i = pl.program_id(0)

        @pl.when(i != num_tiles - 1)
        def _():
            out_ref[...] = jnp.sum(loss, axis=0, keepdims=True)[None]

        @pl.when(i == num_tiles - 1)                       # only last tile pays the mask
        def _():
            row = jax.lax.broadcasted_iota(jnp.int32, (tile_m, 1), 0) + i * tile_m
            masked = jnp.where(row < n_rows, loss, 0.0)
            out_ref[...] = jnp.sum(masked, axis=0, keepdims=True)[None]
    else:
        out_ref[...] = jnp.sum(loss, axis=0, keepdims=True)[None]


def _ce_label_kernel(x_ref, lab_ref, out_ref, *, label_smooth, log_eps, log_1m_eps,
                     n_rows, n_classes, tile_m, num_tiles, need_mask):
    """Single pass, full class axis per block, hard int32 labels (no y stream)."""
    x = x_ref[...].astype(jnp.float32)                     # (TM, C)
    lab = lab_ref[...]                                     # (TM, 1) int32

    m = jnp.max(x, axis=-1, keepdims=True)
    xs = x - m
    lse = jnp.log(jnp.sum(jnp.exp(xs), axis=-1, keepdims=True))
    log_p = jnp.clip(xs - lse, log_eps, log_1m_eps)        # (TM, C)

    col = jax.lax.broadcasted_iota(jnp.int32, x.shape, 1)
    picked = jnp.sum(jnp.where(col == lab, log_p, 0.0), axis=-1, keepdims=True)
    if label_smooth:
        loss_row = (-(1.0 - label_smooth) * picked
                    - (label_smooth / n_classes)
                    * jnp.sum(log_p, axis=-1, keepdims=True))
    else:
        loss_row = -picked                                 # (TM, 1)

    if need_mask:
        i = pl.program_id(0)

        @pl.when(i != num_tiles - 1)
        def _():
            out_ref[...] = loss_row

        @pl.when(i == num_tiles - 1)
        def _():
            row = jax.lax.broadcasted_iota(jnp.int32, (tile_m, 1), 0) + i * tile_m
            out_ref[...] = jnp.where(row < n_rows, loss_row, 0.0)
    else:
        out_ref[...] = loss_row


def _ce_tiled_kernel(x_ref, t_ref, out_ref, m_sc, l_sc, *, use_labels,
                     label_smooth, log_eps, log_1m_eps, n_rows, n_classes,
                     tile_m, tile_c, need_row_mask, need_col_mask):
    """Two-pass class-tiled kernel for very large C.

    Pass p=0 sweeps class tiles computing an online (running-max) logsumexp in
    VMEM scratch; pass p=1 re-streams the class tiles and accumulates the
    per-row loss directly into the resident output block.
    """
    r = pl.program_id(0)
    p = pl.program_id(1)                                   # 0: lse pass, 1: loss pass
    j = pl.program_id(2)

    x = x_ref[...].astype(jnp.float32)                     # (TM, TC)
    if use_labels or need_col_mask:
        col = (jax.lax.broadcasted_iota(jnp.int32, (tile_m, tile_c), 1)
               + j * tile_c)
    col_ok = (col < n_classes) if need_col_mask else None

    @pl.when((p == 0) & (j == 0))
    def _():
        m_sc[...] = jnp.full_like(m_sc, -jnp.inf)
        l_sc[...] = jnp.zeros_like(l_sc)
        out_ref[...] = jnp.zeros_like(out_ref)

    @pl.when(p == 0)
    def _():
        xm = jnp.where(col_ok, x, -jnp.inf) if need_col_mask else x
        m_new = jnp.maximum(m_sc[...], jnp.max(xm, axis=-1, keepdims=True))
        l_sc[...] = (l_sc[...] * jnp.exp(m_sc[...] - m_new)
                     + jnp.sum(jnp.exp(xm - m_new), axis=-1, keepdims=True))
        m_sc[...] = m_new

    @pl.when(p == 1)
    def _():
        lse = jnp.log(l_sc[...])                           # (TM, 1)
        log_p = jnp.clip(x - m_sc[...] - lse, log_eps, log_1m_eps)

        if use_labels:
            lab = t_ref[...]                               # (TM, 1) int32
            picked = jnp.sum(jnp.where(col == lab, log_p, 0.0),
                             axis=-1, keepdims=True)
            if label_smooth:
                lp = jnp.where(col_ok, log_p, 0.0) if need_col_mask else log_p
                loss_row = (-(1.0 - label_smooth) * picked
                            - (label_smooth / n_classes)
                            * jnp.sum(lp, axis=-1, keepdims=True))
            else:
                loss_row = -picked
        else:
            y = t_ref[...].astype(jnp.float32)             # (TM, TC)
            if label_smooth:
                y = y * (1.0 - label_smooth) + label_smooth / n_classes
            loss = -y * log_p
            if need_col_mask:
                loss = jnp.where(col_ok, loss, 0.0)
            loss_row = jnp.sum(loss, axis=-1, keepdims=True)

        if need_row_mask:
            row = jax.lax.broadcasted_iota(jnp.int32, (tile_m, 1), 0) + r * tile_m
            loss_row = jnp.where(row < n_rows, loss_row, 0.0)

        out_ref[...] += loss_row


# ---------------------------------------------------------------------------
# wrapper
# ---------------------------------------------------------------------------
def cross_entropy_loss(x, y=None, *, labels=None, label_smooth=0.0, epsilon=1e-7,
                       tile_m=None, tile_c=None, vmem_budget_bytes=None):
    """Pallas TPU CrossEntropyLoss.forward (class_weight=None, sample_weights=0,
    gamma=None).  Supply dense/soft targets `y` (module semantics) OR hard
    int `labels` of shape (N,) to use the halved-HBM-traffic fast path."""
    assert x.ndim == 2
    n, c = x.shape
    use_labels = labels is not None
    if use_labels:
        labels = jnp.asarray(labels, dtype=jnp.int32).reshape(n, 1)
        by = 0
    else:
        assert y is not None and y.shape == x.shape, "need y or labels"
        by = jnp.dtype(y.dtype).itemsize
    bx = jnp.dtype(x.dtype).itemsize

    cap, budget = _vmem_caps(vmem_budget_bytes)
    per_elem = 2 * bx + 2 * by + 16        # dbl-buffered inputs + f32 temps

    # ----- class-axis tiling decision (only needed for very large C) --------
    if tile_c is None:
        if 8 * c * per_elem > budget:      # even 8 rows of full C won't fit
            tile_c = max(128, min(2048, (budget // (8 * per_elem) // 128) * 128))
        else:
            tile_c = c
    elif tile_c >= c:
        tile_c = c
    class_tiled = tile_c < c
    if class_tiled:
        assert tile_c % 128 == 0, "tile_c must be a multiple of 128"

    # ----- row tile ----------------------------------------------------------
    if tile_m is None:
        tile_m = _pick_tile_m(n, _round_up(tile_c, 128), per_elem, budget)
    assert tile_m == n or tile_m % 8 == 0, "tile_m must be a multiple of 8"
    num_row_tiles = _cdiv(n, tile_m)
    need_row_mask = (n % tile_m) != 0

    # ----- VMEM limit sized from the actual working set ----------------------
    pm, pc = _round_up(tile_m, 8), _round_up(tile_c, 128)
    x_blk = pm * pc * bx
    t_blk = pm * 128 * 4 if use_labels else pm * pc * by
    vmem_limit = _vmem_limit_bytes(cap, x_blk, t_blk, pm * pc)

    log_eps = float(math.log(epsilon))
    log_1m_eps = float(math.log1p(-epsilon))
    ls = float(label_smooth)

    if not class_tiled:
        if use_labels:
            kernel = functools.partial(
                _ce_label_kernel, label_smooth=ls, log_eps=log_eps,
                log_1m_eps=log_1m_eps, n_rows=n, n_classes=c, tile_m=tile_m,
                num_tiles=num_row_tiles, need_mask=need_row_mask)
            out = pl.pallas_call(
                kernel,
                out_shape=jax.ShapeDtypeStruct((num_row_tiles * tile_m, 1),
                                               jnp.float32),
                grid_spec=pltpu.PrefetchScalarGridSpec(
                    num_scalar_prefetch=0, grid=(num_row_tiles,),
                    in_specs=[pl.BlockSpec((tile_m, c), lambda i: (i, 0)),
                              pl.BlockSpec((tile_m, 1), lambda i: (i, 0))],
                    out_specs=pl.BlockSpec((tile_m, 1), lambda i: (i, 0))),
                compiler_params=pltpu.CompilerParams(
                    dimension_semantics=("parallel",),
                    vmem_limit_bytes=vmem_limit),
            )(x, labels)
        else:
            kernel = functools.partial(
                _ce_dense_kernel, label_smooth=ls, log_eps=log_eps,
                log_1m_eps=log_1m_eps, n_rows=n, n_classes=c, tile_m=tile_m,
                num_tiles=num_row_tiles, need_mask=need_row_mask)
            out = pl.pallas_call(
                kernel,
                out_shape=jax.ShapeDtypeStruct((num_row_tiles, 1, c),
                                               jnp.float32),
                grid_spec=pltpu.PrefetchScalarGridSpec(
                    num_scalar_prefetch=0, grid=(num_row_tiles,),
                    in_specs=[pl.BlockSpec((tile_m, c), lambda i: (i, 0)),
                              pl.BlockSpec((tile_m, c), lambda i: (i, 0))],
                    # lane-dense per-class partials; grid axis stays stateless.
                    out_specs=pl.BlockSpec((1, 1, c), lambda i: (i, 0, 0))),
                compiler_params=pltpu.CompilerParams(
                    dimension_semantics=("parallel",),
                    vmem_limit_bytes=vmem_limit),
            )(x, y)
    else:
        num_class_tiles = _cdiv(c, tile_c)
        need_col_mask = (c % tile_c) != 0
        kernel = functools.partial(
            _ce_tiled_kernel, use_labels=use_labels, label_smooth=ls,
            log_eps=log_eps, log_1m_eps=log_1m_eps, n_rows=n, n_classes=c,
            tile_m=tile_m, tile_c=tile_c, need_row_mask=need_row_mask,
            need_col_mask=need_col_mask)
        if use_labels:
            t_spec = pl.BlockSpec((tile_m, 1), lambda r, p, j: (r, 0))
            t_arg = labels
        else:
            # only the loss pass (p==1) actually sweeps the target blocks
            t_spec = pl.BlockSpec((tile_m, tile_c), lambda r, p, j: (r, j * p))
            t_arg = y
        out = pl.pallas_call(
            kernel,
            out_shape=jax.ShapeDtypeStruct((num_row_tiles * tile_m, 1),
                                           jnp.float32),
            grid_spec=pltpu.PrefetchScalarGridSpec(
                num_scalar_prefetch=0,
                grid=(num_row_tiles, 2, num_class_tiles),
                in_specs=[pl.BlockSpec((tile_m, tile_c), lambda r, p, j: (r, j)),
                          t_spec],
                out_specs=pl.BlockSpec((tile_m, 1), lambda r, p, j: (r, 0)),
                scratch_shapes=[pltpu.VMEM((tile_m, 1), jnp.float32),
                                pltpu.VMEM((tile_m, 1), jnp.float32)]),
            compiler_params=pltpu.CompilerParams(
                dimension_semantics=("parallel", "arbitrary", "arbitrary"),
                vmem_limit_bytes=vmem_limit),
        )(x, t_arg)

    # Final tiny reduction + mean over rows done by XLA in the wrapper.
    return jnp.sum(out) / jnp.float32(n)


# ---------------------------------------------------------------------------
# pure-JAX reference (mirrors the PyTorch module's default forward)
# ---------------------------------------------------------------------------
def _reference(x, y, label_smooth=0.0, epsilon=1e-7):
    if label_smooth:
        y = y * (1.0 - label_smooth) + label_smooth / y.shape[1]
    p = jax.nn.softmax(x, axis=1)
    p = jnp.clip(p, epsilon, 1.0 - epsilon)
    return jnp.mean(jnp.sum(-y * jnp.log(p), axis=-1))


if __name__ == "__main__":
    key = jax.random.PRNGKey(0)
    kx, ky, kx2, ky2 = jax.random.split(key, 4)

    # Module-default config: dense one-hot targets, no smoothing.
    N, C = 16, 128
    x = jax.random.normal(kx, (N, C), dtype=jnp.float32)
    labels = jax.random.randint(ky, (N,), 0, C)
    y = jax.nn.one_hot(labels, C, dtype=jnp.float32)

    loss = jax.block_until_ready(cross_entropy_loss(x, y))
    ref = _reference(x, y)
    assert jnp.allclose(loss, ref, rtol=1e-5, atol=1e-5), (loss, ref)

    # Label smoothing (compile-time constant path).
    loss_ls = jax.block_until_ready(cross_entropy_loss(x, y, label_smooth=0.1))
    ref_ls = _reference(x, y, label_smooth=0.1)
    assert jnp.allclose(loss_ls, ref_ls, rtol=1e-5, atol=1e-5), (loss_ls, ref_ls)

    # Integer-label fast path (drops the N x C target stream entirely).
    loss_lab = jax.block_until_ready(cross_entropy_loss(x, labels=labels))
    assert jnp.allclose(loss_lab, ref, rtol=1e-5, atol=1e-5), (loss_lab, ref)
    loss_lab_ls = jax.block_until_ready(
        cross_entropy_loss(x, labels=labels, label_smooth=0.1))
    assert jnp.allclose(loss_lab_ls, ref_ls, rtol=1e-5, atol=1e-5), (loss_lab_ls, ref_ls)

    # bf16 inputs (halves HBM traffic; all math stays f32 in-kernel).
    loss_bf = jax.block_until_ready(
        cross_entropy_loss(x.astype(jnp.bfloat16), y.astype(jnp.bfloat16)))
    ref_bf = _reference(x.astype(jnp.bfloat16).astype(jnp.float32),
                        y.astype(jnp.bfloat16).astype(jnp.float32))
    assert jnp.allclose(loss_bf, ref_bf, rtol=1e-4, atol=1e-4), (loss_bf, ref_bf)

    # Ragged batch (N % tile_m != 0): row mask runs only on the last grid step.
    N2, C2 = 20, 200
    x2 = jax.random.normal(kx2, (N2, C2), dtype=jnp.float32)
    lab2 = jax.random.randint(ky2, (N2,), 0, C2)
    y2 = jax.nn.one_hot(lab2, C2, dtype=jnp.float32)
    loss2 = jax.block_until_ready(cross_entropy_loss(x2, y2, tile_m=8))
    ref2 = _reference(x2, y2)
    assert jnp.allclose(loss2, ref2, rtol=1e-5, atol=1e-5), (loss2, ref2)

    # Class-tiled two-pass path (auto-selected for very large C; forced here via
    # tile_c to exercise online logsumexp + ragged class tile + ragged rows).
    loss3 = jax.block_until_ready(
        cross_entropy_loss(x2, y2, tile_m=8, tile_c=128, label_smooth=0.1))
    ref3 = _reference(x2, y2, label_smooth=0.1)
    assert jnp.allclose(loss3, ref3, rtol=1e-5, atol=1e-5), (loss3, ref3)

    loss4 = jax.block_until_ready(
        cross_entropy_loss(x2, labels=lab2, tile_m=8, tile_c=128, label_smooth=0.1))
    assert jnp.allclose(loss4, ref3, rtol=1e-5, atol=1e-5), (loss4, ref3)

    print("KERNEL_OK")
</pallas_src>

<mosaic_0001>
module attributes {stable_mosaic.version = 11 : i64} {
  func.func @_ce_dense_kernel(%arg0: i32, %arg1: memref<8x128xf32, #tpu.memory_space<vmem>>, %arg2: memref<8x128xf32, #tpu.memory_space<vmem>>, %arg3: memref<1x1x128xf32, #tpu.memory_space<vmem>>) attributes {dimension_semantics = [#tpu.dimension_semantics<parallel>], iteration_bounds = array<i64: 2>, scalar_prefetch = 0 : i64, scratch_operands = 0 : i64, tpu.core_type = #tpu.core_type<tc>, window_params = [{transform_indices = @transform_0, window_bounds = array<i64: 8, 128>}, {transform_indices = @transform_1, window_bounds = array<i64: 8, 128>}, {transform_indices = @transform_2, window_bounds = array<i64: 1, 1, 128>}]} {
    %c0 = arith.constant 0 : index
    %c0_0 = arith.constant 0 : index
    %0 = vector.load %arg1[%c0, %c0_0] : memref<8x128xf32, #tpu.memory_space<vmem>>, vector<8x128xf32>
    %c0_1 = arith.constant 0 : index
    %c0_2 = arith.constant 0 : index
    %1 = vector.load %arg2[%c0_1, %c0_2] : memref<8x128xf32, #tpu.memory_space<vmem>>, vector<8x128xf32>
    %cst = arith.constant dense<0xFF800000> : vector<8xf32>
    %2 = vector.multi_reduction <maximumf>, %0, %cst [1] : vector<8x128xf32> to vector<8xf32>
    %3 = vector.shape_cast %2 : vector<8xf32> to vector<8x1xf32>
    %4 = vector.broadcast %3 : vector<8x1xf32> to vector<8x128xf32>
    %5 = arith.subf %0, %4 : vector<8x128xf32>
    %6 = math.exp %5 : vector<8x128xf32>
    %cst_3 = arith.constant dense<0.000000e+00> : vector<8xf32>
    %7 = vector.multi_reduction <add>, %6, %cst_3 [1] : vector<8x128xf32> to vector<8xf32>
    %8 = vector.shape_cast %7 : vector<8xf32> to vector<8x1xf32>
    %9 = math.log %8 : vector<8x1xf32>
    %10 = vector.broadcast %9 : vector<8x1xf32> to vector<8x128xf32>
    %11 = arith.subf %5, %10 : vector<8x128xf32>
    %cst_4 = arith.constant -16.1180954 : f32
    %cst_5 = arith.constant -1.00000008E-7 : f32
    %12 = vector.broadcast %cst_4 : f32 to vector<8x128xf32>
    %13 = arith.maximumf %12, %11 : vector<8x128xf32>
    %14 = vector.broadcast %cst_5 : f32 to vector<8x128xf32>
    %15 = arith.minimumf %14, %13 : vector<8x128xf32>
    %cst_6 = arith.constant 0.000000e+00 : f32
    %16 = vector.broadcast %cst_6 : f32 to vector<8x128xf32>
    %17 = arith.subf %16, %1 : vector<8x128xf32>
    %18 = arith.mulf %17, %15 : vector<8x128xf32>
    %cst_7 = arith.constant dense<0.000000e+00> : vector<128xf32>
    %19 = vector.multi_reduction <add>, %18, %cst_7 [0] : vector<8x128xf32> to vector<128xf32>
    %20 = vector.shape_cast %19 : vector<128xf32> to vector<1x128xf32>
    %21 = vector.shape_cast %20 : vector<1x128xf32> to vector<1x1x128xf32>
    %c0_8 = arith.constant 0 : index
    %c0_9 = arith.constant 0 : index
    %c0_10 = arith.constant 0 : index
    %22 = vector.load %arg3[%c0_8, %c0_9, %c0_10] : memref<1x1x128xf32, #tpu.memory_space<vmem>>, vector<1x1x128xf32>
    tpu.vector_store %arg3[%c0_8, %c0_9, %c0_10], %21 {strides = array<i32>} : memref<1x1x128xf32, #tpu.memory_space<vmem>>, vector<1x1x128xf32>,
    return
  }
  func.func @transform_0(%arg0: i32) -> (i32, i32) {
    %c0_i32 = arith.constant 0 : i32
    %c0_i32_0 = arith.constant 0 : i32
    return %arg0, %c0_i32 : i32, i32
  }
  func.func @transform_1(%arg0: i32) -> (i32, i32) {
    %c0_i32 = arith.constant 0 : i32
    %c0_i32_0 = arith.constant 0 : i32
    return %arg0, %c0_i32 : i32, i32
  }
  func.func @transform_2(%arg0: i32) -> (i32, i32, i32) {
    %c0_i32 = arith.constant 0 : i32
    %c0_i32_0 = arith.constant 0 : i32
    %c0_i32_1 = arith.constant 0 : i32
    return %arg0, %c0_i32, %c0_i32_0 : i32, i32, i32
  }
}

</mosaic_0001>

<llo_original>
// kernel: tpu_custom_call.1
$region0: #{tpu_custom_call.1}
  #allocation0 [shape = 'u32[]', space=smem, size = 0x4, offset = 0x4, fixed_abs, tag = 'smem constant byte address 0x4 - core index']
  #allocation1 [shape = 'u32[144,128]{1,0:T(1,128)}', space=vmem, size = 0x12000, scoped, tag = 'internal scratch']
  %s0 = inlined_call_operand.hbm [shape: f32[16,128], index: 0, kind: input, shape index: {}]
  %s1 = inlined_call_operand.hbm [shape: f32[16,128], index: 1, kind: input, shape index: {}]
  %s2 = inlined_call_operand.hbm [shape: f32[2,1,128], index: 2, kind: output, shape index: {}]
  %s3 = sld [smem:[#allocation0]]
  $region49: #{tpu_custom_call.1} parent=0
    _
  %s5 = ssub.s32 1, %s3
  %s6 = scalar_select 0, %s5, %s3
  $region1: #{tpu_custom_call.1} parent=0
    #allocation2 [shape = 'u8[8192]{0}', space=vmem, size = 0x2000, scoped, tag = 'input window, operand 0']
    #allocation3 [shape = 's32[2]{0}', space=sflag, size = 0x8, scoped, tag = 'scoped memory for tpu_custom_call.1']
    #allocation4 [shape = 's32[2]{0}', space=sflag, size = 0x8, scoped, tag = 'scoped memory for tpu_custom_call.1']
    #allocation5 [shape = 'u8[8192]{0}', space=vmem, size = 0x2000, scoped, tag = 'input window, operand 1']
    #allocation6 [shape = 's32[2]{0}', space=sflag, size = 0x8, scoped, tag = 'scoped memory for tpu_custom_call.1']
    #allocation7 [shape = 'u8[1024]{0}', space=vmem, size = 0x400, scoped, tag = 'output window, operand 0']
    %7 = vsyncpa [#allocation3], 0
    %s8 = scalar_lea.sflag [#allocation3], 1
    %9 = vsyncpa %s8, 0
    %10 = vsyncpa [#allocation6], 0
    %s11 = scalar_lea.sflag [#allocation6], 1
    %12 = vsyncpa %s11, 0
    %13 = vsyncpa [#allocation4], 0
    %s14 = scalar_lea.sflag [#allocation4], 1
    %15 = vsyncpa %s14, 0
    loop: start=0, step=1, limit=4
    $region2: #{tpu_custom_call.1} parent=1 // loop_pre_header
      _
    $region3: #{tpu_custom_call.1} parent=1 // loop_header
      %s17 = sphi 0, %s21
      %p18 = scmp.ge.s32.totalorder %s17, 4
      %s27 = sphi 0, %s29
      %s30 = sphi 0, %s27
      %s31 = sphi 0, %s30
      %s47 = sphi 0, %s31
      %s53 = sphi 0, %s55
      %s56 = sphi 0, %s53
      %s57 = sphi 0, %s56
      %s73 = sphi 0, %s57
      %s79 = sphi 0, %s81
      %s82 = sphi 0, %s79
      %s83 = sphi 0, %s82
      %s99 = sphi 0, %s83
    $region4: #{tpu_custom_call.1} parent=1 // loop_header_branch
      %20 = sbr.rel (%p18) target = $region8
    $region5: #{tpu_custom_call.1} parent=1 // loop_body
      %s22 = ssub.s32 %s17, 1
      %s23 = ssub.s32 %s17, 2
      %s24 = sadd.s32 %s17, 1
      %s25 = ssub.s32 %s17, %s24
      %p26 = scmp.eq.s32.totalorder %s25, 0
      %s28 = sadd.s32 %s27, 1
      %s29 = scalar_select %p26, %s27, %s28
      %p32 = pneg %p26
      %p33 = scmp.eq.s32.totalorder %s17, 1
      %p34 = por %p32, %p33
      %p35 = scmp.ne.s32.totalorder %s27, %s30
      %p36 = scmp.eq.s32.totalorder %s17, 0
      %p37 = por %p35, %p36
      %p38 = scmp.ne.s32.totalorder %s27, %s30
      %p39 = scmp.eq.s32.totalorder %s22, 1
      %p40 = por %p38, %p39
      %p41 = scmp.ne.s32.totalorder %s30, %s31
      %p42 = scmp.eq.s32.totalorder %s22, 0
      %p43 = por %p41, %p42
      %p44 = scmp.ne.s32.totalorder %s30, %s31
      %p45 = scmp.eq.s32.totalorder %s23, 1
      %p46 = por %p44, %p45
      %p48 = scmp.ne.s32.totalorder %s31, %s47
      %p49 = scmp.eq.s32.totalorder %s23, 0
      %p50 = por %p48, %p49
      %s51 = ssub.s32 %s17, %s24
      %p52 = scmp.eq.s32.totalorder %s51, 0
      %s54 = sadd.s32 %s53, 1
      %s55 = scalar_select %p52, %s53, %s54
      %p58 = pneg %p52
      %p59 = scmp.eq.s32.totalorder %s17, 1
      %p60 = por %p58, %p59
      %p61 = scmp.ne.s32.totalorder %s53, %s56
      %p62 = scmp.eq.s32.totalorder %s17, 0
      %p63 = por %p61, %p62
      %p64 = scmp.ne.s32.totalorder %s53, %s56
      %p65 = scmp.eq.s32.totalorder %s22, 1
      %p66 = por %p64, %p65
      %p67 = scmp.ne.s32.totalorder %s56, %s57
      %p68 = scmp.eq.s32.totalorder %s22, 0
      %p69 = por %p67, %p68
      %p70 = scmp.ne.s32.totalorder %s56, %s57
      %p71 = scmp.eq.s32.totalorder %s23, 1
      %p72 = por %p70, %p71
      %p74 = scmp.ne.s32.totalorder %s57, %s73
      %p75 = scmp.eq.s32.totalorder %s23, 0
      %p76 = por %p74, %p75
      %s77 = ssub.s32 %s17, %s24
      %p78 = scmp.eq.s32.totalorder %s77, 0
      %s80 = sadd.s32 %s79, 1
      %s81 = scalar_select %p78, %s79, %s80
      %p84 = pneg %p78
      %p85 = scmp.eq.s32.totalorder %s17, 1
      %p86 = por %p84, %p85
      %p87 = scmp.ne.s32.totalorder %s79, %s82
      %p88 = scmp.eq.s32.totalorder %s17, 0
      %p89 = por %p87, %p88
      %p90 = scmp.ne.s32.totalorder %s79, %s82
      %p91 = scmp.eq.s32.totalorder %s22, 1
      %p92 = por %p90, %p91
      %p93 = scmp.ne.s32.totalorder %s82, %s83
      %p94 = scmp.eq.s32.totalorder %s22, 0
      %p95 = por %p93, %p94
      %p96 = scmp.ne.s32.totalorder %s82, %s83
      %p97 = scmp.eq.s32.totalorder %s23, 1
      %p98 = por %p96, %p97
      %p100 = scmp.ne.s32.totalorder %s83, %s99
      %p101 = scmp.eq.s32.totalorder %s23, 0
      %p102 = por %p100, %p101
      %p103 = scmp.le.s32.totalorder 1, %s17
      %p104 = scmp.lt.s32.totalorder %s17, 3
      %p105 = pnand %p103, %p104
      %p106 = pneg %p105
      // Predicated region
      $region9: #{tpu_custom_call.1} parent=5 // pred_check
        _
      $region10: #{tpu_custom_call.1} parent=5 // pred_check_branch
        %108 = sbr.rel (%p105) target = $region12
      $region11: #{tpu_custom_call.1} parent=5 // pred_region
        %s109 = ssub.s32 %s17, 1
      $region12: #{tpu_custom_call.1} parent=5 // pred_fallthru
        _
      %p110 = scmp.lt.s32.totalorder %s17, 2
      // Predicated region
      $region13: #{tpu_custom_call.1} parent=5 // pred_check
        %p111 = pneg %p110
      $region14: #{tpu_custom_call.1} parent=5 // pred_check_branch
        %113 = sbr.rel (%p111) target = $region16
      $region15: #{tpu_custom_call.1} parent=5 // pred_region
        // Predicated region
        $region17: #{tpu_custom_call.1} parent=15 // pred_check
          %p114 = pneg %p37
        $region18: #{tpu_custom_call.1} parent=15 // pred_check_branch
          %116 = sbr.rel (%p114) target = $region20
        $region19: #{tpu_custom_call.1} parent=15 // pred_region
          %s117 = sand.u32 %s27, 1
          %s118 = scalar_lea.sflag [#allocation3], %s117
          %s119 = sand.u32 %s27, 1
          %s120 = smul.addr %s119, 8
          %s121 = scalar_lea.vmem [#allocation2], %s120
          %s123 = ssub.s32 128, 128
          %124 = vsyncadd %s118, %s123
          %s125 = smul.addr %s17, 128
          %s126 = scalar_lea.hbm %s0, %s125
          %s128 = sshll.u32 %s121, 4
          %s129 = int_to_ptr.vmem [resolvable:$true] %s128
          %131 = dma.hbm_to_vmem [thread:$0]  %s126, 128, %s129, %s118
        $region20: #{tpu_custom_call.1} parent=15 // pred_fallthru
          _
        // Predicated region
        $region21: #{tpu_custom_call.1} parent=15 // pred_check
          %p132 = pneg %p63
        $region22: #{tpu_custom_call.1} parent=15 // pred_check_branch
          %134 = sbr.rel (%p132) target = $region24
        $region23: #{tpu_custom_call.1} parent=15 // pred_region
          %s135 = sand.u32 %s53, 1
          %s136 = scalar_lea.sflag [#allocation6], %s135
          %s137 = sand.u32 %s53, 1
          %s138 = smul.addr %s137, 8
          %s139 = scalar_lea.vmem [#allocation5], %s138
          %s141 = ssub.s32 128, 128
          %142 = vsyncadd %s136, %s141
          %s143 = smul.addr %s17, 128
          %s144 = scalar_lea.hbm %s1, %s143
          %s146 = sshll.u32 %s139, 4
          %s147 = int_to_ptr.vmem [resolvable:$true] %s146
          %149 = dma.hbm_to_vmem [thread:$0]  %s144, 128, %s147, %s136
        $region24: #{tpu_custom_call.1} parent=15 // pred_fallthru
          _
      $region16: #{tpu_custom_call.1} parent=5 // pred_fallthru
        _
      %p150 = scmp.le.s32.totalorder 1, %s17
      %p151 = scmp.lt.s32.totalorder %s17, 3
      %p152 = pnand %p150, %p151
      %p153 = pneg %p152
      // Predicated region
      $region25: #{tpu_custom_call.1} parent=5 // pred_check
        _
      $region26: #{tpu_custom_call.1} parent=5 // pred_check_branch
        %155 = sbr.rel (%p152) target = $region28
      $region27: #{tpu_custom_call.1} parent=5 // pred_region
        %s156 = ssub.s32 %s17, 1
        %s157 = sand.u32 %s30, 1
        %s158 = scalar_lea.sflag [#allocation3], %s157
        %s159 = sand.u32 %s30, 1
        %s160 = smul.addr %s159, 8
        %s161 = scalar_lea.vmem [#allocation2], %s160
        // Predicated region
        $region29: #{tpu_custom_call.1} parent=27 // pred_check
          %p162 = pneg %p43
        $region30: #{tpu_custom_call.1} parent=27 // pred_check_branch
          %164 = sbr.rel (%p162) target = $region32
        $region31: #{tpu_custom_call.1} parent=27 // pred_region
          %165 = dma.done %s158, 128
        $region32: #{tpu_custom_call.1} parent=27 // pred_fallthru
          _
        %s166 = sand.u32 %s56, 1
        %s167 = scalar_lea.sflag [#allocation6], %s166
        %s168 = sand.u32 %s56, 1
        %s169 = smul.addr %s168, 8
        %s170 = scalar_lea.vmem [#allocation5], %s169
        // Predicated region
        $region33: #{tpu_custom_call.1} parent=27 // pred_check
          %p171 = pneg %p69
        $region34: #{tpu_custom_call.1} parent=27 // pred_check_branch
          %173 = sbr.rel (%p171) target = $region36
        $region35: #{tpu_custom_call.1} parent=27 // pred_region
          %174 = dma.done %s167, 128
        $region36: #{tpu_custom_call.1} parent=27 // pred_fallthru
          _
        %s175 = sand.u32 %s30, 1
        %s176 = scalar_lea.sflag [#allocation3], %s175
        %s177 = sand.u32 %s30, 1
        %s178 = smul.addr %s177, 8
        %s179 = scalar_lea.vmem [#allocation2], %s178
        %p180 = pneg %p43
        %p181 = pneg %p40
        %s182 = sand.u32 %s56, 1
        %s183 = scalar_lea.sflag [#allocation6], %s182
        %s184 = sand.u32 %s56, 1
        %s185 = smul.addr %s184, 8
        %s186 = scalar_lea.vmem [#allocation5], %s185
        %p187 = pneg %p69
        %p188 = pneg %p66
        %p189 = pneg %p95
        %p190 = pneg %p92
        %s191 = sand.u32 %s82, 1
        %s192 = scalar_lea.sflag [#allocation4], %s191
        %s193 = sand.u32 %s82, 1
        %s194 = scalar_lea.vmem [#allocation7], %s193
        %v195 = vld [vmem:[%s161] sm:$0xff]
        %v196 = vld [vmem:[%s170] sm:$0xff]
        %197 = vmax.xlane.f32.xlu0 %v195
        %v198 = vpop.xlane.xlu0 %197
        %v199 = vsub.f32 %v195, %v198
        %v200 = vmul.f32 %v199, 1.442695
        %v201 = vpow.pop %v200
        %202 = vadd.xlane.f32.xlu0 %v201
        %v203 = vpop.xlane.xlu0 %202
        %v204 = vlog2.pop %v203
        %v205 = vmul.f32 %v204, 0.6931472
        %v206 = vsub.f32 %v199, %v205
        %v207 = vmax.f32 %v206, -16.118095
        %v208 = vmin.f32 %v207, -1.0000001e-07
        %v209 = vsub.f32 0.0, %v196
        %v210 = vmul.f32 %v209, %v208
        %v211 = vrot.slane %v210, 4
        %v212 = vadd.f32 %v210, %v211
        %v213 = vrot.slane %v212, 2
        %v214 = vadd.f32 %v212, %v213
        %v215 = vrot.slane %v214, 1
        %v216 = vadd.f32 %v214, %v215
        %217 = vst [vmem:[%s194] sm:$0x1] %v216
        %s218 = sand.u32 %s82, 1
        %s219 = scalar_lea.sflag [#allocation4], %s218
        %s220 = sand.u32 %s82, 1
        %s221 = scalar_lea.vmem [#allocation7], %s220
        // Predicated region
        $region37: #{tpu_custom_call.1} parent=27 // pred_check
          %p222 = pneg %p92
        $region38: #{tpu_custom_call.1} parent=27 // pred_check_branch
          %224 = sbr.rel (%p222) target = $region40
        $region39: #{tpu_custom_call.1} parent=27 // pred_region
          %s226 = ssub.s32 16, 16
          %227 = vsyncadd %s219, %s226
          %s228 = smul.addr %s22, 16
          %s229 = scalar_lea.hbm %s2, %s228
          %s231 = sshll.u32 %s221, 4
          %s232 = int_to_ptr.vmem [resolvable:$true] %s231
          %234 = dma.vmem_to_hbm [thread:$0]  %s232, 16, %s229, %s219
        $region40: #{tpu_custom_call.1} parent=27 // pred_fallthru
          _
      $region28: #{tpu_custom_call.1} parent=5 // pred_fallthru
        _
      %p235 = scmp.le.s32.totalorder 2, %s17
      // Predicated region
      $region41: #{tpu_custom_call.1} parent=5 // pred_check
        %p236 = pneg %p235
      $region42: #{tpu_custom_call.1} parent=5 // pred_check_branch
        %238 = sbr.rel (%p236) target = $region44
      $region43: #{tpu_custom_call.1} parent=5 // pred_region
        %s239 = ssub.s32 %s17, 2
        // Predicated region
        $region45: #{tpu_custom_call.1} parent=43 // pred_check
          %p240 = pneg %p98
        $region46: #{tpu_custom_call.1} parent=43 // pred_check_branch
          %242 = sbr.rel (%p240) target = $region48
        $region47: #{tpu_custom_call.1} parent=43 // pred_region
          %s243 = sand.u32 %s83, 1
          %s244 = scalar_lea.sflag [#allocation4], %s243
          %s245 = sand.u32 %s83, 1
          %s246 = scalar_lea.vmem [#allocation7], %s245
          %247 = dma.done %s244, 16
        $region48: #{tpu_custom_call.1} parent=43 // pred_fallthru
          _
      $region44: #{tpu_custom_call.1} parent=5 // pred_fallthru
        _
    $region6: #{tpu_custom_call.1} parent=1 // loop_footer
      %s21 = sadd.s32 1, %s17
    $region7: #{tpu_custom_call.1} parent=1 // loop_footer_branch
      %16 = sbr.rel target = $region3
    $region8: #{tpu_custom_call.1} parent=1 // loop_exit
      _
    %248 = vsyncpa [#allocation3], 1
    %s249 = scalar_lea.sflag [#allocation3], 1
    %250 = vsyncpa %s249, 1
    %251 = vsyncpa [#allocation6], 1
    %s252 = scalar_lea.sflag [#allocation6], 1
    %253 = vsyncpa %s252, 1
    %254 = vsyncpa [#allocation4], 1
    %s255 = scalar_lea.sflag [#allocation4], 1
    %256 = vsyncpa %s255, 1

</llo_original>
